<compile_context>
chip_gen: v5e
topology: v5e:2x2
jax: 0.10.0
libtpu: 0.0.40
codegen_flags: <defaults>
</compile_context>

<pallas_src>
import functools

import jax
import jax.numpy as jnp
from jax import lax
from jax.experimental import pallas as pl
from jax.experimental.pallas import tpu as pltpu

_LANE = 128
_SUBLANE = 8


def _round_up(x, m):
    return ((x + m - 1) // m) * m


def _make_policy_kernel(c_pad, d_pad, dim_problem, offs):
    """Build the kernel with static layout constants baked in."""
    o_w1, o_b1, o_w2, o_b2, o_w3, o_b3 = offs

    def kernel(ctx_ref, par_ref, u_ref, sol_ref, logp_ref):
        f32 = jnp.float32
        bf16 = jnp.bfloat16

        x = ctx_ref[...]                                        # (TB, Cp) f32

        # ---- 3-layer MLP: bf16 MXU operands, f32 accumulate, f32 elementwise ----
        w1 = par_ref[o_w1:o_w1 + c_pad, :]                      # (Cp, Dp)
        h = jnp.dot(x.astype(bf16), w1.astype(bf16), preferred_element_type=f32)
        h = jnp.maximum(h + par_ref[o_b1:o_b1 + 1, :], 0.0)     # relu(linear_1)

        w2 = par_ref[o_w2:o_w2 + d_pad, :]                      # (Dp, Dp)
        h = jnp.dot(h.astype(bf16), w2.astype(bf16), preferred_element_type=f32)
        h = jnp.maximum(h + par_ref[o_b2:o_b2 + 1, :], 0.0)     # relu(linear_2)

        w3 = par_ref[o_w3:o_w3 + d_pad, :]                      # (Dp, Dp)
        z = jnp.dot(h.astype(bf16), w3.astype(bf16), preferred_element_type=f32)
        z = z + par_ref[o_b3:o_b3 + 1, :]                       # logits (TB, Dp)

        # ---- stable sigmoid / log-pmf via softplus(-z) ----
        neg_z = -z
        sp = jnp.maximum(neg_z, 0.0) + jnp.log(1.0 + jnp.exp(-jnp.abs(neg_z)))
        probs = jnp.exp(-sp)                                    # sigmoid(z)

        # ---- Bernoulli sample: u < p (uniform u supplied by the wrapper) ----
        sol = (u_ref[...] < probs).astype(f32)
        sol_ref[...] = sol                                      # lane-dense store

        # log prod_i p_i^{s_i} (1-p_i)^{1-s_i} == sum_i (s_i-1)*z_i - softplus(-z_i)
        per = (sol - 1.0) * z - sp
        lane = lax.broadcasted_iota(jnp.int32, per.shape, 1)
        per = jnp.where(lane < dim_problem, per, 0.0)           # mask padded lanes
        logp = jnp.sum(per, axis=-1, keepdims=True)             # (TB, 1)
        # Broadcast across lanes -> unmasked full-width store; wrapper reads col 0.
        logp_ref[...] = jnp.broadcast_to(logp, logp_ref.shape)

    return kernel


def _pack_params(params, c_pad, d_pad):
    """Pack W1,b1,W2,b2,W3,b3 into one (rows, d_pad) f32 array (single DMA).

    Every segment starts at a row offset that is a multiple of 8 (sublane
    aligned); weights are stored transposed ((in, out)) so no in-kernel
    transpose is needed; padded rows/cols are zero.
    """
    w1, b1, w2, b2, w3, b3 = params

    def seg(a, rows, cols):
        a = a.astype(jnp.float32)
        return jnp.pad(a, ((0, rows - a.shape[0]), (0, cols - a.shape[1])))

    segs = [
        seg(w1, c_pad, d_pad),      # (Cp, Dp)
        seg(b1, _SUBLANE, d_pad),   # (8,  Dp)
        seg(w2, d_pad, d_pad),      # (Dp, Dp)
        seg(b2, _SUBLANE, d_pad),
        seg(w3, d_pad, d_pad),
        seg(b3, _SUBLANE, d_pad),
    ]
    offs, r = [], 0
    for s in segs:
        offs.append(r)
        r += s.shape[0]
    return jnp.concatenate(segs, axis=0), tuple(offs)


@functools.partial(jax.jit, static_argnames=("block_b",))
def nn_initialisation_policy_forward_batch(contexts, params, key, *, block_b=128):
    """Batched forward.  contexts: (B, dim_context) -> (solutions (B, P), log_probs (B,))."""
    w1 = params[0]
    w3 = params[4]
    dim_context = w1.shape[0]
    dim_hidden = w1.shape[1]
    dim_problem = w3.shape[1]
    assert contexts.shape[1] == dim_context

    batch = contexts.shape[0]
    c_pad = _round_up(dim_context, _SUBLANE)
    d_pad = _round_up(max(dim_hidden, dim_problem), _LANE)      # lane-dense width

    tb = min(block_b, _round_up(batch, _SUBLANE))               # batch tile
    b_pad = _round_up(batch, tb)

    ctx = jnp.pad(contexts.astype(jnp.float32),
                  ((0, b_pad - batch), (0, c_pad - dim_context)))
    packed, offs = _pack_params(params, c_pad, d_pad)
    n_rows = packed.shape[0]

    # TODO(synk): uniforms come from jax.random on the host (same Bernoulli
    # distribution, different stream than torch's global RNG); the on-chip
    # pltpu PRNG is not used because it has no interpret/CPU lowering.
    u = jax.random.uniform(key, (b_pad, d_pad), dtype=jnp.float32)

    kernel = _make_policy_kernel(c_pad, d_pad, dim_problem, offs)

    sol_p, logp_p = pl.pallas_call(
        kernel,
        grid=(b_pad // tb,),
        in_specs=[
            pl.BlockSpec((tb, c_pad), lambda i: (i, 0)),        # context tile
            # Constant index_map -> packed weights DMA'd once, VMEM-resident.
            pl.BlockSpec((n_rows, d_pad), lambda i: (0, 0)),
            pl.BlockSpec((tb, d_pad), lambda i: (i, 0)),        # uniforms
        ],
        out_specs=(
            pl.BlockSpec((tb, d_pad), lambda i: (i, 0)),        # solutions
            pl.BlockSpec((tb, d_pad), lambda i: (i, 0)),        # log_prob (lane-bcast)
        ),
        out_shape=(
            jax.ShapeDtypeStruct((b_pad, d_pad), jnp.float32),
            jax.ShapeDtypeStruct((b_pad, d_pad), jnp.float32),
        ),
        compiler_params=pltpu.CompilerParams(
            dimension_semantics=("parallel",)),                 # megacore on v7x
    )(ctx, packed, u)

    return sol_p[:batch, :dim_problem], logp_p[:batch, 0]


def nn_initialisation_policy_forward(context, params, key):
    """Single-context API matching the torch module: returns (solution, scalar log_prob)."""
    sol, logp = nn_initialisation_policy_forward_batch(
        context.reshape(1, -1), params, key)
    return sol[0], logp[0]


def init_params(key, dim_problem, dim_context, dim_hidden):
    """Deterministic synthetic parameters (torch.nn.Linear-style uniform init).

    Weights are stored transposed ((in, out)) relative to torch's (out, in).
    """
    ks = jax.random.split(key, 6)

    def lin(kw, kb, fan_in, fan_out):
        bound = 1.0 / jnp.sqrt(float(fan_in))
        w = jax.random.uniform(kw, (fan_in, fan_out), jnp.float32, -bound, bound)
        b = jax.random.uniform(kb, (1, fan_out), jnp.float32, -bound, bound)
        return w, b

    w1, b1 = lin(ks[0], ks[1], dim_context, dim_hidden)
    w2, b2 = lin(ks[2], ks[3], dim_hidden, dim_hidden)
    w3, b3 = lin(ks[4], ks[5], dim_hidden, dim_problem)
    return (w1, b1, w2, b2, w3, b3)


if __name__ == "__main__":
    dim_problem, dim_context, dim_hidden = 16, 32, 32
    batch = 256   # batched sampling: fills MXU rows, 2-step parallel grid on v7x

    key = jax.random.PRNGKey(0)
    k_par, k_ctx, k_s0, k_s1 = jax.random.split(key, 4)
    params = init_params(k_par, dim_problem, dim_context, dim_hidden)
    contexts = jax.random.normal(k_ctx, (batch, dim_context), dtype=jnp.float32)

    # Batched path (main perf path).
    sols, logps = nn_initialisation_policy_forward_batch(contexts, params, k_s0)
    # Module-equivalent single-context path.
    sol1, logp1 = nn_initialisation_policy_forward(contexts[0], params, k_s1)
    jax.block_until_ready((sols, logps, sol1, logp1))

    assert sols.shape == (batch, dim_problem)
    assert logps.shape == (batch,)
    assert bool(jnp.all((sols == 0.0) | (sols == 1.0)))
    assert bool(jnp.all(jnp.isfinite(logps)))
    assert bool(jnp.all(logps <= 0.0))
    assert sol1.shape == (dim_problem,)
    assert logp1.shape == ()
    assert bool(jnp.isfinite(logp1))
    assert bool(jnp.all((sol1 == 0.0) | (sol1 == 1.0)))

    print("KERNEL_OK")
</pallas_src>

<mosaic_0001>
module attributes {stable_mosaic.version = 11 : i64} {
  func.func @kernel(%arg0: i32, %arg1: memref<128x32xf32, #tpu.memory_space<vmem>>, %arg2: memref<312x128xf32, #tpu.memory_space<vmem>>, %arg3: memref<128x128xf32, #tpu.memory_space<vmem>>, %arg4: memref<128x128xf32, #tpu.memory_space<vmem>>, %arg5: memref<128x128xf32, #tpu.memory_space<vmem>>) attributes {dimension_semantics = [#tpu.dimension_semantics<parallel>], iteration_bounds = array<i64: 2>, scalar_prefetch = 0 : i64, scratch_operands = 0 : i64, tpu.core_type = #tpu.core_type<tc>, window_params = [{transform_indices = @transform_0, window_bounds = array<i64: 128, 32>}, {pipeline_mode = #tpu.pipeline_mode<synchronous>, transform_indices = @transform_1, window_bounds = array<i64: 312, 128>}, {transform_indices = @transform_2, window_bounds = array<i64: 128, 128>}, {transform_indices = @transform_3, window_bounds = array<i64: 128, 128>}, {transform_indices = @transform_4, window_bounds = array<i64: 128, 128>}]} {
    %c0 = arith.constant 0 : index
    %c0_0 = arith.constant 0 : index
    %0 = vector.load %arg1[%c0, %c0_0] : memref<128x32xf32, #tpu.memory_space<vmem>>, vector<128x32xf32>
    %c0_1 = arith.constant 0 : index
    %c0_2 = arith.constant 0 : index
    %1 = vector.load %arg2[%c0_1, %c0_2] : memref<312x128xf32, #tpu.memory_space<vmem>>, vector<32x128xf32>
    %2 = arith.truncf %0 : vector<128x32xf32> to vector<128x32xbf16>
    %3 = arith.truncf %1 : vector<32x128xf32> to vector<32x128xbf16>
    %cst = arith.constant dense<0.000000e+00> : vector<128x128xf32>
    %4 = tpu.matmul %2, %3, %cst {dimension_numbers = #tpu.dot_dimension_numbers<[1], [0], [0], [1], [0, 0, 1, 1], [], []>} : vector<128x32xbf16>, vector<32x128xbf16>, vector<128x128xf32> -> vector<128x128xf32>
    %c32 = arith.constant 32 : index
    %c0_3 = arith.constant 0 : index
    %5 = vector.load %arg2[%c32, %c0_3] : memref<312x128xf32, #tpu.memory_space<vmem>>, vector<1x128xf32>
    %6 = vector.broadcast %5 : vector<1x128xf32> to vector<128x128xf32>
    %7 = arith.addf %4, %6 : vector<128x128xf32>
    %cst_4 = arith.constant 0.000000e+00 : f32
    %8 = vector.broadcast %cst_4 : f32 to vector<128x128xf32>
    %9 = arith.maximumf %7, %8 : vector<128x128xf32>
    %c40 = arith.constant 40 : index
    %c0_5 = arith.constant 0 : index
    %10 = vector.load %arg2[%c40, %c0_5] : memref<312x128xf32, #tpu.memory_space<vmem>>, vector<128x128xf32>
    %11 = arith.truncf %9 : vector<128x128xf32> to vector<128x128xbf16>
    %12 = arith.truncf %10 : vector<128x128xf32> to vector<128x128xbf16>
    %cst_6 = arith.constant dense<0.000000e+00> : vector<128x128xf32>
    %13 = tpu.matmul %11, %12, %cst_6 {dimension_numbers = #tpu.dot_dimension_numbers<[1], [0], [0], [1], [0, 0, 1, 1], [], []>} : vector<128x128xbf16>, vector<128x128xbf16>, vector<128x128xf32> -> vector<128x128xf32>
    %c168 = arith.constant 168 : index
    %c0_7 = arith.constant 0 : index
    %14 = vector.load %arg2[%c168, %c0_7] : memref<312x128xf32, #tpu.memory_space<vmem>>, vector<1x128xf32>
    %15 = vector.broadcast %14 : vector<1x128xf32> to vector<128x128xf32>
    %16 = arith.addf %13, %15 : vector<128x128xf32>
    %cst_8 = arith.constant 0.000000e+00 : f32
    %17 = vector.broadcast %cst_8 : f32 to vector<128x128xf32>
    %18 = arith.maximumf %16, %17 : vector<128x128xf32>
    %c176 = arith.constant 176 : index
    %c0_9 = arith.constant 0 : index
    %19 = vector.load %arg2[%c176, %c0_9] : memref<312x128xf32, #tpu.memory_space<vmem>>, vector<128x128xf32>
    %20 = arith.truncf %18 : vector<128x128xf32> to vector<128x128xbf16>
    %21 = arith.truncf %19 : vector<128x128xf32> to vector<128x128xbf16>
    %cst_10 = arith.constant dense<0.000000e+00> : vector<128x128xf32>
    %22 = tpu.matmul %20, %21, %cst_10 {dimension_numbers = #tpu.dot_dimension_numbers<[1], [0], [0], [1], [0, 0, 1, 1], [], []>} : vector<128x128xbf16>, vector<128x128xbf16>, vector<128x128xf32> -> vector<128x128xf32>
    %c304 = arith.constant 304 : index
    %c0_11 = arith.constant 0 : index
    %23 = vector.load %arg2[%c304, %c0_11] : memref<312x128xf32, #tpu.memory_space<vmem>>, vector<1x128xf32>
    %24 = vector.broadcast %23 : vector<1x128xf32> to vector<128x128xf32>
    %25 = arith.addf %22, %24 : vector<128x128xf32>
    %cst_12 = arith.constant 0.000000e+00 : f32
    %26 = vector.broadcast %cst_12 : f32 to vector<128x128xf32>
    %27 = arith.subf %26, %25 : vector<128x128xf32>
    %cst_13 = arith.constant 0.000000e+00 : f32
    %28 = vector.broadcast %cst_13 : f32 to vector<128x128xf32>
    %29 = arith.maximumf %27, %28 : vector<128x128xf32>
    %30 = math.absf %27 : vector<128x128xf32>
    %cst_14 = arith.constant 0.000000e+00 : f32
    %31 = vector.broadcast %cst_14 : f32 to vector<128x128xf32>
    %32 = arith.subf %31, %30 : vector<128x128xf32>
    %33 = math.exp %32 : vector<128x128xf32>
    %cst_15 = arith.constant 1.000000e+00 : f32
    %34 = vector.broadcast %cst_15 : f32 to vector<128x128xf32>
    %35 = arith.addf %34, %33 : vector<128x128xf32>
    %36 = math.log %35 : vector<128x128xf32>
    %37 = arith.addf %29, %36 : vector<128x128xf32>
    %cst_16 = arith.constant 0.000000e+00 : f32
    %38 = vector.broadcast %cst_16 : f32 to vector<128x128xf32>
    %39 = arith.subf %38, %37 : vector<128x128xf32>
    %40 = math.exp %39 : vector<128x128xf32>
    %c0_17 = arith.constant 0 : index
    %c0_18 = arith.constant 0 : index
    %41 = vector.load %arg3[%c0_17, %c0_18] : memref<128x128xf32, #tpu.memory_space<vmem>>, vector<128x128xf32>
    %42 = arith.cmpf olt, %41, %40 : vector<128x128xf32>
    %43 = arith.extui %42 : vector<128x128xi1> to vector<128x128xi32>
    %44 = arith.sitofp %43 : vector<128x128xi32> to vector<128x128xf32>
    %c0_19 = arith.constant 0 : index
    %c0_20 = arith.constant 0 : index
    %45 = vector.load %arg4[%c0_19, %c0_20] : memref<128x128xf32, #tpu.memory_space<vmem>>, vector<128x128xf32>
    tpu.vector_store %arg4[%c0_19, %c0_20], %44 {strides = array<i32>} : memref<128x128xf32, #tpu.memory_space<vmem>>, vector<128x128xf32>,
    %cst_21 = arith.constant 1.000000e+00 : f32
    %46 = vector.broadcast %cst_21 : f32 to vector<128x128xf32>
    %47 = arith.subf %44, %46 : vector<128x128xf32>
    %48 = arith.mulf %47, %25 : vector<128x128xf32>
    %49 = arith.subf %48, %37 : vector<128x128xf32>
    %50 = tpu.iota {dimensions = array<i32: 1>} : vector<128x128xi32>
    %c16_i32 = arith.constant 16 : i32
    %51 = vector.broadcast %c16_i32 : i32 to vector<128x128xi32>
    %52 = arith.cmpi slt, %50, %51 : vector<128x128xi32>
    %cst_22 = arith.constant 0.000000e+00 : f32
    %53 = vector.broadcast %cst_22 : f32 to vector<128x128xf32>
    %54 = arith.select %52, %49, %53 : vector<128x128xi1>, vector<128x128xf32>
    %cst_23 = arith.constant dense<0.000000e+00> : vector<128xf32>
    %55 = vector.multi_reduction <add>, %54, %cst_23 [1] : vector<128x128xf32> to vector<128xf32>
    %56 = vector.shape_cast %55 : vector<128xf32> to vector<128x1xf32>
    %57 = vector.shape_cast %56 : vector<128x1xf32> to vector<128x1xf32>
    %58 = vector.broadcast %57 : vector<128x1xf32> to vector<128x128xf32>
    %c0_24 = arith.constant 0 : index
    %c0_25 = arith.constant 0 : index
    %59 = vector.load %arg5[%c0_24, %c0_25] : memref<128x128xf32, #tpu.memory_space<vmem>>, vector<128x128xf32>
    tpu.vector_store %arg5[%c0_24, %c0_25], %58 {strides = array<i32>} : memref<128x128xf32, #tpu.memory_space<vmem>>, vector<128x128xf32>,
    return
  }
  func.func @transform_0(%arg0: i32) -> (i32, i32) {
    %c0_i32 = arith.constant 0 : i32
    %c0_i32_0 = arith.constant 0 : i32
    return %arg0, %c0_i32 : i32, i32
  }
  func.func @transform_1(%arg0: i32) -> (i32, i32) {
    %c0_i32 = arith.constant 0 : i32
    %c0_i32_0 = arith.constant 0 : i32
    %c0_i32_1 = arith.constant 0 : i32
    return %c0_i32, %c0_i32_0 : i32, i32
  }
  func.func @transform_2(%arg0: i32) -> (i32, i32) {
    %c0_i32 = arith.constant 0 : i32
    %c0_i32_0 = arith.constant 0 : i32
    return %arg0, %c0_i32 : i32, i32
  }
  func.func @transform_3(%arg0: i32) -> (i32, i32) {
    %c0_i32 = arith.constant 0 : i32
    %c0_i32_0 = arith.constant 0 : i32
    return %arg0, %c0_i32 : i32, i32
  }
  func.func @transform_4(%arg0: i32) -> (i32, i32) {
    %c0_i32 = arith.constant 0 : i32
    %c0_i32_0 = arith.constant 0 : i32
    return %arg0, %c0_i32 : i32, i32
  }
}

</mosaic_0001>

<llo_original>
// kernel: nn_initialisation_policy_forward_batch.1
$region0: #{nn_initialisation_policy_forward_batch.1}
  #allocation0 [shape = 'u32[]', space=smem, size = 0x4, offset = 0x4, fixed_abs, tag = 'smem constant byte address 0x4 - core index']
  #allocation1 [shape = 'u32[72,128]{1,0:T(1,128)}', space=vmem, size = 0x9000, scoped, tag = 'internal scratch']
  %s0 = inlined_call_operand.vmem [shape: f32[256,32], index: 0, kind: input, shape index: {}]
  %s1 = inlined_call_operand.vmem [shape: f32[312,128], index: 1, kind: input, shape index: {}]
  %s2 = inlined_call_operand.vmem [shape: f32[256,128], index: 2, kind: input, shape index: {}]
  %s3 = inlined_call_operand.vmem [shape: f32[256,128], index: 3, kind: output, shape index: {0}]
  %s4 = inlined_call_operand.vmem [shape: f32[256,128], index: 4, kind: output, shape index: {1}]
  %5 = xla_tuple %s3, %s4
  %s6 = sld [smem:[#allocation0]]
  $region53: #{nn_initialisation_policy_forward_batch.1} parent=0
    _
  %s8 = ssub.s32 1, %s6
  %s9 = scalar_select 0, %s8, %s6
  loop: start=0, step=1, limit=4
  $region2: #{nn_initialisation_policy_forward_batch.1} parent=0 // loop_pre_header
    _
  $region3: #{nn_initialisation_policy_forward_batch.1} parent=0 // loop_header
    %s11 = sphi 0, %s15
    %p12 = scmp.ge.s32.totalorder %s11, 4
    %s21 = sphi 0, %s23
    %s24 = sphi 0, %s21
    %s25 = sphi 0, %s24
    %s41 = sphi 0, %s25
    %s45 = sphi 0, %s45
    %s47 = sphi 0, %s45
    %s48 = sphi 0, %s47
    %s62 = sphi 0, %s48
    %s68 = sphi 0, %s70
    %s71 = sphi 0, %s68
    %s72 = sphi 0, %s71
    %s88 = sphi 0, %s72
    %s94 = sphi 0, %s96
    %s97 = sphi 0, %s94
    %s98 = sphi 0, %s97
    %s114 = sphi 0, %s98
    %s120 = sphi 0, %s122
    %s123 = sphi 0, %s120
    %s124 = sphi 0, %s123
    %s140 = sphi 0, %s124
  $region4: #{nn_initialisation_policy_forward_batch.1} parent=0 // loop_header_branch
    %14 = sbr.rel (%p12) target = $region8
  $region5: #{nn_initialisation_policy_forward_batch.1} parent=0 // loop_body
    %s16 = ssub.s32 %s11, 1
    %s17 = ssub.s32 %s11, 2
    %s18 = sadd.s32 %s11, 1
    %s19 = ssub.s32 %s11, %s18
    %p20 = scmp.eq.s32.totalorder %s19, 0
    %s22 = sadd.s32 %s21, 1
    %s23 = scalar_select %p20, %s21, %s22
    %p26 = pneg %p20
    %p27 = scmp.eq.s32.totalorder %s11, 1
    %p28 = por %p26, %p27
    %p29 = scmp.ne.s32.totalorder %s21, %s24
    %p30 = scmp.eq.s32.totalorder %s11, 0
    %p31 = por %p29, %p30
    %p32 = scmp.ne.s32.totalorder %s21, %s24
    %p33 = scmp.eq.s32.totalorder %s16, 1
    %p34 = por %p32, %p33
    %p35 = scmp.ne.s32.totalorder %s24, %s25
    %p36 = scmp.eq.s32.totalorder %s16, 0
    %p37 = por %p35, %p36
    %p38 = scmp.ne.s32.totalorder %s24, %s25
    %p39 = scmp.eq.s32.totalorder %s17, 1
    %p40 = por %p38, %p39
    %p42 = scmp.ne.s32.totalorder %s25, %s41
    %p43 = scmp.eq.s32.totalorder %s17, 0
    %p44 = por %p42, %p43
    %s46 = sadd.s32 %s45, 1
    %p49 = scmp.eq.s32.totalorder %s11, 1
    %p50 = scmp.ne.s32.totalorder %s45, %s47
    %p51 = scmp.eq.s32.totalorder %s11, 0
    %p52 = por %p50, %p51
    %p53 = scmp.ne.s32.totalorder %s45, %s47
    %p54 = scmp.eq.s32.totalorder %s16, 1
    %p55 = por %p53, %p54
    %p56 = scmp.ne.s32.totalorder %s47, %s48
    %p57 = scmp.eq.s32.totalorder %s16, 0
    %p58 = por %p56, %p57
    %p59 = scmp.ne.s32.totalorder %s47, %s48
    %p60 = scmp.eq.s32.totalorder %s17, 1
    %p61 = por %p59, %p60
    %p63 = scmp.ne.s32.totalorder %s48, %s62
    %p64 = scmp.eq.s32.totalorder %s17, 0
    %p65 = por %p63, %p64
    %s66 = ssub.s32 %s11, %s18
    %p67 = scmp.eq.s32.totalorder %s66, 0
    %s69 = sadd.s32 %s68, 1
    %s70 = scalar_select %p67, %s68, %s69
    %p73 = pneg %p67
    %p74 = scmp.eq.s32.totalorder %s11, 1
    %p75 = por %p73, %p74
    %p76 = scmp.ne.s32.totalorder %s68, %s71
    %p77 = scmp.eq.s32.totalorder %s11, 0
    %p78 = por %p76, %p77
    %p79 = scmp.ne.s32.totalorder %s68, %s71
    %p80 = scmp.eq.s32.totalorder %s16, 1
    %p81 = por %p79, %p80
    %p82 = scmp.ne.s32.totalorder %s71, %s72
    %p83 = scmp.eq.s32.totalorder %s16, 0
    %p84 = por %p82, %p83
    %p85 = scmp.ne.s32.totalorder %s71, %s72
    %p86 = scmp.eq.s32.totalorder %s17, 1
    %p87 = por %p85, %p86
    %p89 = scmp.ne.s32.totalorder %s72, %s88
    %p90 = scmp.eq.s32.totalorder %s17, 0
    %p91 = por %p89, %p90
    %s92 = ssub.s32 %s11, %s18
    %p93 = scmp.eq.s32.totalorder %s92, 0
    %s95 = sadd.s32 %s94, 1
    %s96 = scalar_select %p93, %s94, %s95
    %p99 = pneg %p93
    %p100 = scmp.eq.s32.totalorder %s11, 1
    %p101 = por %p99, %p100
    %p102 = scmp.ne.s32.totalorder %s94, %s97
    %p103 = scmp.eq.s32.totalorder %s11, 0
    %p104 = por %p102, %p103
    %p105 = scmp.ne.s32.totalorder %s94, %s97
    %p106 = scmp.eq.s32.totalorder %s16, 1
    %p107 = por %p105, %p106
    %p108 = scmp.ne.s32.totalorder %s97, %s98
    %p109 = scmp.eq.s32.totalorder %s16, 0
    %p110 = por %p108, %p109
    %p111 = scmp.ne.s32.totalorder %s97, %s98
    %p112 = scmp.eq.s32.totalorder %s17, 1
    %p113 = por %p111, %p112
    %p115 = scmp.ne.s32.totalorder %s98, %s114
    %p116 = scmp.eq.s32.totalorder %s17, 0
    %p117 = por %p115, %p116
    %s118 = ssub.s32 %s11, %s18
    %p119 = scmp.eq.s32.totalorder %s118, 0
    %s121 = sadd.s32 %s120, 1
    %s122 = scalar_select %p119, %s120, %s121
    %p125 = pneg %p119
    %p126 = scmp.eq.s32.totalorder %s11, 1
    %p127 = por %p125, %p126
    %p128 = scmp.ne.s32.totalorder %s120, %s123
    %p129 = scmp.eq.s32.totalorder %s11, 0
    %p130 = por %p128, %p129
    %p131 = scmp.ne.s32.totalorder %s120, %s123
    %p132 = scmp.eq.s32.totalorder %s16, 1
    %p133 = por %p131, %p132
    %p134 = scmp.ne.s32.totalorder %s123, %s124
    %p135 = scmp.eq.s32.totalorder %s16, 0
    %p136 = por %p134, %p135
    %p137 = scmp.ne.s32.totalorder %s123, %s124
    %p138 = scmp.eq.s32.totalorder %s17, 1
    %p139 = por %p137, %p138
    %p141 = scmp.ne.s32.totalorder %s124, %s140
    %p142 = scmp.eq.s32.totalorder %s17, 0
    %p143 = por %p141, %p142
    %p144 = scmp.le.s32.totalorder 1, %s11
    %p145 = scmp.lt.s32.totalorder %s11, 3
    %p146 = pnand %p144, %p145
    %p147 = pneg %p146
    // Predicated region
    $region9: #{nn_initialisation_policy_forward_batch.1} parent=5 // pred_check
      _
    $region10: #{nn_initialisation_policy_forward_batch.1} parent=5 // pred_check_branch
      %149 = sbr.rel (%p146) target = $region12
    $region11: #{nn_initialisation_policy_forward_batch.1} parent=5 // pred_region
      %s150 = ssub.s32 %s11, 1
      // Predicated region
      $region13: #{nn_initialisation_policy_forward_batch.1} parent=11 // pred_check
        %p151 = pneg %p58
      $region14: #{nn_initialisation_policy_forward_batch.1} parent=11 // pred_check_branch
        %153 = sbr.rel (%p151) target = $region16
      $region15: #{nn_initialisation_policy_forward_batch.1} parent=11 // pred_region
        _
      $region16: #{nn_initialisation_policy_forward_batch.1} parent=11 // pred_fallthru
        _
    $region12: #{nn_initialisation_policy_forward_batch.1} parent=5 // pred_fallthru
      _
    %p154 = scmp.lt.s32.totalorder %s11, 2
    // Predicated region
    $region17: #{nn_initialisation_policy_forward_batch.1} parent=5 // pred_check
      %p155 = pneg %p154
    $region18: #{nn_initialisation_policy_forward_batch.1} parent=5 // pred_check_branch
      %157 = sbr.rel (%p155) target = $region20
    $region19: #{nn_initialisation_policy_forward_batch.1} parent=5 // pred_region
      // Predicated region
      $region21: #{nn_initialisation_policy_forward_batch.1} parent=19 // pred_check
        %p158 = pneg %p31
      $region22: #{nn_initialisation_policy_forward_batch.1} parent=19 // pred_check_branch
        %160 = sbr.rel (%p158) target = $region24
      $region23: #{nn_initialisation_policy_forward_batch.1} parent=19 // pred_region
        %s161 = smul.u32 16, %s11
        %p162 = scmp.lt.s32.totalorder %s161, 31
        %s163 = scalar_select %p162, %s161, 31
        %s164 = smul.addr %s163, 8
        %s165 = scalar_lea.vmem %s0, %s164
        %s166 = smul.u32 16, %s11
      $region24: #{nn_initialisation_policy_forward_batch.1} parent=19 // pred_fallthru
        _
      // Predicated region
      $region25: #{nn_initialisation_policy_forward_batch.1} parent=19 // pred_check
        %p167 = pneg %p78
      $region26: #{nn_initialisation_policy_forward_batch.1} parent=19 // pred_check_branch
        %169 = sbr.rel (%p167) target = $region28
      $region27: #{nn_initialisation_policy_forward_batch.1} parent=19 // pred_region
        %s170 = smul.u32 16, %s11
        %p171 = scmp.lt.s32.totalorder %s170, 31
        %s172 = scalar_select %p171, %s170, 31
        %s173 = smul.addr %s172, 8
        %s174 = scalar_lea.vmem %s2, %s173
        %s175 = smul.u32 16, %s11
      $region28: #{nn_initialisation_policy_forward_batch.1} parent=19 // pred_fallthru
        _
    $region20: #{nn_initialisation_policy_forward_batch.1} parent=5 // pred_fallthru
      _
    %p176 = scmp.le.s32.totalorder 1, %s11
    %p177 = scmp.lt.s32.totalorder %s11, 3
    %p178 = pnand %p176, %p177
    %p179 = pneg %p178
    // Predicated region
    $region29: #{nn_initialisation_policy_forward_batch.1} parent=5 // pred_check
      _
    $region30: #{nn_initialisation_policy_forward_batch.1} parent=5 // pred_check_branch
      %181 = sbr.rel (%p178) target = $region32
    $region31: #{nn_initialisation_policy_forward_batch.1} parent=5 // pred_region
      %s182 = ssub.s32 %s11, 1
      %s183 = smul.u32 16, %s16
      %p184 = scmp.lt.s32.totalorder %s183, 31
      %s185 = scalar_select %p184, %s183, 31
      %s186 = smul.addr %s185, 8
      %s187 = scalar_lea.vmem %s0, %s186
      %p188 = pneg %p37
      %p189 = pneg %p34
      %p190 = pneg %p58
      %p191 = pneg %p55
      %s192 = smul.u32 16, %s16
      %p193 = scmp.lt.s32.totalorder %s192, 31
      %s194 = scalar_select %p193, %s192, 31
      %s195 = smul.addr %s194, 8
      %s196 = scalar_lea.vmem %s2, %s195
      %p197 = pneg %p84
      %p198 = pneg %p81
      %p199 = pneg %p110
      %p200 = pneg %p107
      %s201 = smul.u32 16, %s16
      %p202 = scmp.lt.s32.totalorder %s201, 31
      %s203 = scalar_select %p202, %s201, 31
      %s204 = smul.addr %s203, 8
      %s205 = scalar_lea.vmem %s3, %s204
      %p206 = pneg %p136
      %p207 = pneg %p133
      %s208 = smul.u32 16, %s16
      %p209 = scmp.lt.s32.totalorder %s208, 31
      %s210 = scalar_select %p209, %s208, 31
      %s211 = smul.addr %s210, 8
      %s212 = scalar_lea.vmem %s4, %s211
      %s213 = smul.u32 16, %s16
      %p214 = scmp.lt.s32.totalorder %s213, 31
      %s215 = scalar_select %p214, %s213, 31
      %s216 = smul.addr %s215, 8
      %s217 = scalar_lea.vmem %s0, %s216
      %s218 = smul.u32 16, %s16
      %s219 = smul.u32 16, %s16
      %p220 = scmp.lt.s32.totalorder %s219, 31
      %s221 = scalar_select %p220, %s219, 31
      %s222 = smul.addr %s221, 8
      %s223 = scalar_lea.vmem %s2, %s222
      %s224 = smul.u32 16, %s16
      %s225 = smul.u32 16, %s16
      %p226 = scmp.lt.s32.totalorder %s225, 31
      %s227 = scalar_select %p226, %s225, 31
      %s228 = smul.addr %s227, 8
      %s229 = scalar_lea.vmem %s3, %s228
      %s230 = smul.u32 16, %s16
      %s231 = smul.u32 16, %s16
      %p232 = scmp.lt.s32.totalorder %s231, 31
      %s233 = scalar_select %p232, %s231, 31
      %s234 = smul.addr %s233, 8
      %s235 = scalar_lea.vmem %s4, %s234
      %s236 = smul.u32 16, %s16
      %v238 = vld [vmem:[%s217] sm:$0xff]
      %v239 = vld [vmem:[%s217 + $0x8] sm:$0xff]
      %v240 = vld [vmem:[%s217 + $0x10] sm:$0xff]
      %v241 = vld [vmem:[%s217 + $0x18] sm:$0xff]
      %v242 = vld [vmem:[%s217 + $0x20] sm:$0xff]
      %v243 = vld [vmem:[%s217 + $0x28] sm:$0xff]
      %v244 = vld [vmem:[%s217 + $0x30] sm:$0xff]
      %v245 = vld [vmem:[%s217 + $0x38] sm:$0xff]
      %v246 = vld [vmem:[%s217 + $0x40] sm:$0xff]
      %v247 = vld [vmem:[%s217 + $0x48] sm:$0xff]
      %v248 = vld [vmem:[%s217 + $0x50] sm:$0xff]
      %v249 = vld [vmem:[%s217 + $0x58] sm:$0xff]
      %v250 = vld [vmem:[%s217 + $0x60] sm:$0xff]
      %v251 = vld [vmem:[%s217 + $0x68] sm:$0xff]
      %v252 = vld [vmem:[%s217 + $0x70] sm:$0xff]
      %v253 = vld [vmem:[%s217 + $0x78] sm:$0xff]
      %v254 = vld [vmem:[%s1] sm:$0xff]
      %v255 = vld [vmem:[%s1 + $0x8] sm:$0xff]
      %v256 = vld [vmem:[%s1 + $0x10] sm:$0xff]
      %v257 = vld [vmem:[%s1 + $0x18] sm:$0xff]
      %v258 = vpack.c.bf16 %v239, %v238
      %v259 = vpack.c.bf16 %v241, %v240
      %v260 = vpack.c.bf16 %v243, %v242
      %v261 = vpack.c.bf16 %v245, %v244
      %v262 = vpack.c.bf16 %v247, %v246
      %v263 = vpack.c.bf16 %v249, %v248
      %v264 = vpack.c.bf16 %v251, %v250
      %v265 = vpack.c.bf16 %v253, %v252
      %v266 = vpack.c.bf16 %v255, %v254
      %v267 = vpack.c.bf16 %v257, %v256
      %v268 = vld [vmem:[%s1 + $0x20] sm:$0x1]
      %v269 = vperm.slane %v268, 0
      %vm270 = vcmask 261120
      %v272 = vsel %vm270, %v258, 0
      %v275 = vsel %vm270, %v259, 0
      %v278 = vsel %vm270, %v260, 0
      %v281 = vsel %vm270, %v261, 0
      %v284 = vsel %vm270, %v262, 0
      %v287 = vsel %vm270, %v263, 0
      %v290 = vsel %vm270, %v264, 0
      %v293 = vsel %vm270, %v265, 0
      %295 = vmatpush.bf16.msra.mxu0 0
      %296 = vmatpush.bf16.msra.mxu0 0
      %297 = vmatpush.bf16.msra.mxu0 0
      %298 = vmatpush.bf16.msra.mxu0 0
      %299 = vmatpush.bf16.msra.mxu0 0
      %300 = vmatpush.bf16.msra.mxu0 0
      %301 = vmatpush.bf16.msra.mxu0 %v267
      %302 = vmatpush.bf16.msra.mxu0 %v266
      %303 = vmatmul.bf16.gmra.mxu0 %v272
      %v304 = vpop.f32.mrf.mxu0
      %v305 = vadd.f32 %v269, %v304
      %v306 = vpop.f32.mrf.mxu0
      %v307 = vadd.f32 %v269, %v306
      %308 = vmatmul.bf16.gmra.mxu0 %v275
      %v309 = vpop.f32.mrf.mxu0
      %v310 = vadd.f32 %v269, %v309
      %v311 = vpop.f32.mrf.mxu0
      %v312 = vadd.f32 %v269, %v311
      %313 = vmatmul.bf16.gmra.mxu0 %v278
      %v314 = vpop.f32.mrf.mxu0
      %v315 = vadd.f32 %v269, %v314
      %v316 = vpop.f32.mrf.mxu0
      %v317 = vadd.f32 %v269, %v316
      %318 = vmatmul.bf16.gmra.mxu0 %v281
      %v319 = vpop.f32.mrf.mxu0
      %v320 = vadd.f32 %v269, %v319
      %v321 = vpop.f32.mrf.mxu0
      %v322 = vadd.f32 %v269, %v321
      %323 = vmatmul.bf16.gmra.mxu0 %v284
      %v324 = vpop.f32.mrf.mxu0
      %v325 = vadd.f32 %v269, %v324
      %v326 = vpop.f32.mrf.mxu0
      %v327 = vadd.f32 %v269, %v326
      %328 = vmatmul.bf16.gmra.mxu0 %v287
      %v329 = vpop.f32.mrf.mxu0
      %v330 = vadd.f32 %v269, %v329
      %v331 = vpop.f32.mrf.mxu0
      %v332 = vadd.f32 %v269, %v331
      %333 = vmatmul.bf16.gmra.mxu0 %v290
      %v334 = vpop.f32.mrf.mxu0
      %v335 = vadd.f32 %v269, %v334
      %v336 = vpop.f32.mrf.mxu0
      %v337 = vadd.f32 %v269, %v336
      %338 = vmatmul.bf16.gmra.mxu0 %v293
      %v339 = vpop.f32.mrf.mxu0
      %v340 = vadd.f32 %v269, %v339
      %v341 = vpop.f32.mrf.mxu0
      %v342 = vadd.f32 %v269, %v341
      %343 = vdwg.mxu0
      %v344 = vmax.f32 %v305, 0.0
      %v345 = vmax.f32 %v307, 0.0
      %v346 = vmax.f32 %v310, 0.0
      %v347 = vmax.f32 %v312, 0.0
      %v348 = vmax.f32 %v315, 0.0
      %v349 = vmax.f32 %v317, 0.0
      %v350 = vmax.f32 %v320, 0.0
      %v351 = vmax.f32 %v322, 0.0
      %v352 = vmax.f32 %v325, 0.0
      %v353 = vmax.f32 %v327, 0.0
      %v354 = vmax.f32 %v330, 0.0
      %v355 = vmax.f32 %v332, 0.0
      %v356 = vmax.f32 %v335, 0.0
      %v357 = vmax.f32 %v337, 0.0
      %v358 = vmax.f32 %v340, 0.0
      %v359 = vmax.f32 %v342, 0.0
      %v360 = vld [vmem:[%s1 + $0x28] sm:$0xff]
      %v361 = vld [vmem:[%s1 + $0x30] sm:$0xff]
      %v362 = vld [vmem:[%s1 + $0x38] sm:$0xff]
      %v363 = vld [vmem:[%s1 + $0x40] sm:$0xff]
      %v364 = vld [vmem:[%s1 + $0x48] sm:$0xff]
      %v365 = vld [vmem:[%s1 + $0x50] sm:$0xff]
      %v366 = vld [vmem:[%s1 + $0x58] sm:$0xff]
      %v367 = vld [vmem:[%s1 + $0x60] sm:$0xff]
      %v368 = vld [vmem:[%s1 + $0x68] sm:$0xff]
      %v369 = vld [vmem:[%s1 + $0x70] sm:$0xff]
      %v370 = vld [vmem:[%s1 + $0x78] sm:$0xff]
      %v371 = vld [vmem:[%s1 + $0x80] sm:$0xff]
      %v372 = vld [vmem:[%s1 + $0x88] sm:$0xff]
      %v373 = vld [vmem:[%s1 + $0x90] sm:$0xff]
      %v374 = vld [vmem:[%s1 + $0x98] sm:$0xff]
      %v375 = vld [vmem:[%s1 + $0xa0] sm:$0xff]
      %v376 = vpack.c.bf16 %v345, %v344
      %v377 = vpack.c.bf16 %v347, %v346
      %v378 = vpack.c.bf16 %v349, %v348
      %v379 = vpack.c.bf16 %v351, %v350
      %v380 = vpack.c.bf16 %v353, %v352
      %v381 = vpack.c.bf16 %v355, %v354
      %v382 = vpack.c.bf16 %v357, %v356
      %v383 = vpack.c.bf16 %v359, %v358
      %v384 = vpack.c.bf16 %v361, %v360
      %v385 = vpack.c.bf16 %v363, %v362
      %v386 = vpack.c.bf16 %v365, %v364
      %v387 = vpack.c.bf16 %v367, %v366
      %v388 = vpack.c.bf16 %v369, %v368
      %v389 = vpack.c.bf16 %v371, %v370
      %v390 = vpack.c.bf16 %v373, %v372
      %v391 = vpack.c.bf16 %v375, %v374
      %v392 = vld [vmem:[%s1 + $0xa8] sm:$0x1]
      %v393 = vperm.slane %v392, 0
      %394 = vmatpush.bf16.msra.mxu0 %v391
      %395 = vmatpush.bf16.msra.mxu0 %v390
      %396 = vmatpush.bf16.msra.mxu0 %v389
      %397 = vmatpush.bf16.msra.mxu0 %v388
      %398 = vmatpush.bf16.msra.mxu0 %v387
      %399 = vmatpush.bf16.msra.mxu0 %v386
      %400 = vmatpush.bf16.msra.mxu0 %v385
      %401 = vmatpush.bf16.msra.mxu0 %v384
      %402 = vmatmul.bf16.gmra.mxu0 %v376
      %v403 = vpop.f32.mrf.mxu0
      %v404 = vadd.f32 %v393, %v403
      %v405 = vpop.f32.mrf.mxu0
      %v406 = vadd.f32 %v393, %v405
      %407 = vmatmul.bf16.gmra.mxu0 %v377
      %v408 = vpop.f32.mrf.mxu0
      %v409 = vadd.f32 %v393, %v408
      %v410 = vpop.f32.mrf.mxu0
      %v411 = vadd.f32 %v393, %v410
      %412 = vmatmul.bf16.gmra.mxu0 %v378
      %v413 = vpop.f32.mrf.mxu0
      %v414 = vadd.f32 %v393, %v413
      %v415 = vpop.f32.mrf.mxu0
      %v416 = vadd.f32 %v393, %v415
      %417 = vmatmul.bf16.gmra.mxu0 %v379
      %v418 = vpop.f32.mrf.mxu0
      %v419 = vadd.f32 %v393, %v418
      %v420 = vpop.f32.mrf.mxu0
      %v421 = vadd.f32 %v393, %v420
      %422 = vmatmul.bf16.gmra.mxu0 %v380
      %v423 = vpop.f32.mrf.mxu0
      %v424 = vadd.f32 %v393, %v423
      %v425 = vpop.f32.mrf.mxu0
      %v426 = vadd.f32 %v393, %v425
      %427 = vmatmul.bf16.gmra.mxu0 %v381
      %v428 = vpop.f32.mrf.mxu0
      %v429 = vadd.f32 %v393, %v428
      %v430 = vpop.f32.mrf.mxu0
      %v431 = vadd.f32 %v393, %v430
      %432 = vmatmul.bf16.gmra.mxu0 %v382
      %v433 = vpop.f32.mrf.mxu0
      %v434 = vadd.f32 %v393, %v433
      %v435 = vpop.f32.mrf.mxu0
      %v436 = vadd.f32 %v393, %v435
      %437 = vmatmul.bf16.gmra.mxu0 %v383
      %v438 = vpop.f32.mrf.mxu0
      %v439 = vadd.f32 %v393, %v438
      %v440 = vpop.f32.mrf.mxu0
      %v441 = vadd.f32 %v393, %v440
      %442 = vdwg.mxu0
      %v443 = vmax.f32 %v404, 0.0
      %v444 = vmax.f32 %v406, 0.0
      %v445 = vmax.f32 %v409, 0.0
      %v446 = vmax.f32 %v411, 0.0
      %v447 = vmax.f32 %v414, 0.0
      %v448 = vmax.f32 %v416, 0.0
      %v449 = vmax.f32 %v419, 0.0
      %v450 = vmax.f32 %v421, 0.0
      %v451 = vmax.f32 %v424, 0.0
      %v452 = vmax.f32 %v426, 0.0
      %v453 = vmax.f32 %v429, 0.0
      %v454 = vmax.f32 %v431, 0.0
      %v455 = vmax.f32 %v434, 0.0
      %v456 = vmax.f32 %v436, 0.0
      %v457 = vmax.f32 %v439, 0.0
      %v458 = vmax.f32 %v441, 0.0
      %v459 = vld [vmem:[%s1 + $0xb0] sm:$0xff]
      %v460 = vld [vmem:[%s1 + $0xb8] sm:$0xff]
      %v461 = vld [vmem:[%s1 + $0xc0] sm:$0xff]
      %v462 = vld [vmem:[%s1 + $0xc8] sm:$0xff]
      %v463 = vld [vmem:[%s1 + $0xd0] sm:$0xff]
      %v464 = vld [vmem:[%s1 + $0xd8] sm:$0xff]
      %v465 = vld [vmem:[%s1 + $0xe0] sm:$0xff]
      %v466 = vld [vmem:[%s1 + $0xe8] sm:$0xff]
      %v467 = vld [vmem:[%s1 + $0xf0] sm:$0xff]
      %v468 = vld [vmem:[%s1 + $0xf8] sm:$0xff]
      %v469 = vld [vmem:[%s1 + $0x100] sm:$0xff]
      %v470 = vld [vmem:[%s1 + $0x108] sm:$0xff]
      %v471 = vld [vmem:[%s1 + $0x110] sm:$0xff]
      %v472 = vld [vmem:[%s1 + $0x118] sm:$0xff]
      %v473 = vld [vmem:[%s1 + $0x120] sm:$0xff]
      %v474 = vld [vmem:[%s1 + $0x128] sm:$0xff]
      %v475 = vpack.c.bf16 %v444, %v443
      %v476 = vpack.c.bf16 %v446, %v445
      %v477 = vpack.c.bf16 %v448, %v447
      %v478 = vpack.c.bf16 %v450, %v449
      %v479 = vpack.c.bf16 %v452, %v451
      %v480 = vpack.c.bf16 %v454, %v453
      %v481 = vpack.c.bf16 %v456, %v455
      %v482 = vpack.c.bf16 %v458, %v457
      %v483 = vpack.c.bf16 %v460, %v459
      %v484 = vpack.c.bf16 %v462, %v461
      %v485 = vpack.c.bf16 %v464, %v463
      %v486 = vpack.c.bf16 %v466, %v465
      %v487 = vpack.c.bf16 %v468, %v467
      %v488 = vpack.c.bf16 %v470, %v469
      %v489 = vpack.c.bf16 %v472, %v471
      %v490 = vpack.c.bf16 %v474, %v473
      %v491 = vld [vmem:[%s1 + $0x130] sm:$0x1]
      %v492 = vperm.slane %v491, 0
      %493 = vmatpush.bf16.msra.mxu0 %v490
      %494 = vmatpush.bf16.msra.mxu0 %v489
      %495 = vmatpush.bf16.msra.mxu0 %v488
      %496 = vmatpush.bf16.msra.mxu0 %v487
      %497 = vmatpush.bf16.msra.mxu0 %v486
      %498 = vmatpush.bf16.msra.mxu0 %v485
      %499 = vmatpush.bf16.msra.mxu0 %v484
      %500 = vmatpush.bf16.msra.mxu0 %v483
      %501 = vmatmul.bf16.gmra.mxu0 %v475
      %v502 = vpop.f32.mrf.mxu0
      %v503 = vadd.f32 %v492, %v502
      %v504 = vpop.f32.mrf.mxu0
      %v505 = vadd.f32 %v492, %v504
      %506 = vmatmul.bf16.gmra.mxu0 %v476
      %v507 = vpop.f32.mrf.mxu0
      %v508 = vadd.f32 %v492, %v507
      %v509 = vpop.f32.mrf.mxu0
      %v510 = vadd.f32 %v492, %v509
      %511 = vmatmul.bf16.gmra.mxu0 %v477
      %v512 = vpop.f32.mrf.mxu0
      %v513 = vadd.f32 %v492, %v512
      %v514 = vpop.f32.mrf.mxu0
      %v515 = vadd.f32 %v492, %v514
      %516 = vmatmul.bf16.gmra.mxu0 %v478
      %v517 = vpop.f32.mrf.mxu0
      %v518 = vadd.f32 %v492, %v517
      %v519 = vpop.f32.mrf.mxu0
      %v520 = vadd.f32 %v492, %v519
      %521 = vmatmul.bf16.gmra.mxu0 %v479
      %v522 = vpop.f32.mrf.mxu0
      %v523 = vadd.f32 %v492, %v522
      %v524 = vpop.f32.mrf.mxu0
      %v525 = vadd.f32 %v492, %v524
      %526 = vmatmul.bf16.gmra.mxu0 %v480
      %v527 = vpop.f32.mrf.mxu0
      %v528 = vadd.f32 %v492, %v527
      %v529 = vpop.f32.mrf.mxu0
      %v530 = vadd.f32 %v492, %v529
      %531 = vmatmul.bf16.gmra.mxu0 %v481
      %v532 = vpop.f32.mrf.mxu0
      %v533 = vadd.f32 %v492, %v532
      %v534 = vpop.f32.mrf.mxu0
      %v535 = vadd.f32 %v492, %v534
      %536 = vmatmul.bf16.gmra.mxu0 %v482
      %v537 = vpop.f32.mrf.mxu0
      %v538 = vadd.f32 %v492, %v537
      %v539 = vpop.f32.mrf.mxu0
      %v540 = vadd.f32 %v492, %v539
      %541 = vdwg.mxu0
      %v542 = vsub.f32 0.0, %v503
      %v543 = vsub.f32 0.0, %v505
      %v544 = vsub.f32 0.0, %v508
      %v545 = vsub.f32 0.0, %v510
      %v546 = vsub.f32 0.0, %v513
      %v547 = vsub.f32 0.0, %v515
      %v548 = vsub.f32 0.0, %v518
      %v549 = vsub.f32 0.0, %v520
      %v550 = vsub.f32 0.0, %v523
      %v551 = vsub.f32 0.0, %v525
      %v552 = vsub.f32 0.0, %v528
      %v553 = vsub.f32 0.0, %v530
      %v554 = vsub.f32 0.0, %v533
      %v555 = vsub.f32 0.0, %v535
      %v556 = vsub.f32 0.0, %v538
      %v557 = vsub.f32 0.0, %v540
      %v558 = vmax.f32 %v542, 0.0
      %v559 = vmax.f32 %v543, 0.0
      %v560 = vmax.f32 %v544, 0.0
      %v561 = vmax.f32 %v545, 0.0
      %v562 = vmax.f32 %v546, 0.0
      %v563 = vmax.f32 %v547, 0.0
      %v564 = vmax.f32 %v548, 0.0
      %v565 = vmax.f32 %v549, 0.0
      %v566 = vmax.f32 %v550, 0.0
      %v567 = vmax.f32 %v551, 0.0
      %v568 = vmax.f32 %v552, 0.0
      %v569 = vmax.f32 %v553, 0.0
      %v570 = vmax.f32 %v554, 0.0
      %v571 = vmax.f32 %v555, 0.0
      %v572 = vmax.f32 %v556, 0.0
      %v573 = vmax.f32 %v557, 0.0
      %v574 = vand.u32 2147483647, %v542
      %v575 = vand.u32 2147483647, %v543
      %v576 = vand.u32 2147483647, %v544
      %v577 = vand.u32 2147483647, %v545
      %v578 = vand.u32 2147483647, %v546
      %v579 = vand.u32 2147483647, %v547
      %v580 = vand.u32 2147483647, %v548
      %v581 = vand.u32 2147483647, %v549
      %v582 = vand.u32 2147483647, %v550
      %v583 = vand.u32 2147483647, %v551
      %v584 = vand.u32 2147483647, %v552
      %v585 = vand.u32 2147483647, %v553
      %v586 = vand.u32 2147483647, %v554
      %v587 = vand.u32 2147483647, %v555
      %v588 = vand.u32 2147483647, %v556
      %v589 = vand.u32 2147483647, %v557
      %v590 = vsub.f32 0.0, %v574
      %v591 = vsub.f32 0.0, %v575
      %v592 = vsub.f32 0.0, %v576
      %v593 = vsub.f32 0.0, %v577
      %v594 = vsub.f32 0.0, %v578
      %v595 = vsub.f32 0.0, %v579
      %v596 = vsub.f32 0.0, %v580
      %v597 = vsub.f32 0.0, %v581
      %v598 = vsub.f32 0.0, %v582
      %v599 = vsub.f32 0.0, %v583
      %v600 = vsub.f32 0.0, %v584
      %v601 = vsub.f32 0.0, %v585
      %v602 = vsub.f32 0.0, %v586
      %v603 = vsub.f32 0.0, %v587
      %v604 = vsub.f32 0.0, %v588
      %v605 = vsub.f32 0.0, %v589
      %v606 = vmul.f32 %v590, 1.442695
      %v607 = vpow.pop %v606
      %v608 = vmul.f32 %v591, 1.442695
      %v609 = vpow.pop %v608
      %v610 = vmul.f32 %v592, 1.442695
      %v611 = vpow.pop %v610
      %v612 = vmul.f32 %v593, 1.442695
      %v613 = vpow.pop %v612
      %v614 = vmul.f32 %v594, 1.442695
      %v615 = vpow.pop %v614
      %v616 = vmul.f32 %v595, 1.442695
      %v617 = vpow.pop %v616
      %v618 = vmul.f32 %v596, 1.442695
      %v619 = vpow.pop %v618
      %v620 = vmul.f32 %v597, 1.442695
      %v621 = vpow.pop %v620
      %v622 = vmul.f32 %v598, 1.442695
      %v623 = vpow.pop %v622
      %v624 = vmul.f32 %v599, 1.442695
      %v625 = vpow.pop %v624
      %v626 = vmul.f32 %v600, 1.442695
      %v627 = vpow.pop %v626
      %v628 = vmul.f32 %v601, 1.442695
      %v629 = vpow.pop %v628
      %v630 = vmul.f32 %v602, 1.442695
      %v631 = vpow.pop %v630
      %v632 = vmul.f32 %v603, 1.442695
      %v633 = vpow.pop %v632
      %v634 = vmul.f32 %v604, 1.442695
      %v635 = vpow.pop %v634
      %v636 = vmul.f32 %v605, 1.442695
      %v637 = vpow.pop %v636
      %v638 = vadd.f32 %v607, 1.0
      %v639 = vadd.f32 %v609, 1.0
      %v640 = vadd.f32 %v611, 1.0
      %v641 = vadd.f32 %v613, 1.0
      %v642 = vadd.f32 %v615, 1.0
      %v643 = vadd.f32 %v617, 1.0
      %v644 = vadd.f32 %v619, 1.0
      %v645 = vadd.f32 %v621, 1.0
      %v646 = vadd.f32 %v623, 1.0
      %v647 = vadd.f32 %v625, 1.0
      %v648 = vadd.f32 %v627, 1.0
      %v649 = vadd.f32 %v629, 1.0
      %v650 = vadd.f32 %v631, 1.0
      %v651 = vadd.f32 %v633, 1.0
      %v652 = vadd.f32 %v635, 1.0
      %v653 = vadd.f32 %v637, 1.0
      %v654 = vlog2.pop %v638
      %v655 = vmul.f32 %v654, 0.6931472
      %v656 = vlog2.pop %v639
      %v657 = vmul.f32 %v656, 0.6931472
      %v658 = vlog2.pop %v640
      %v659 = vmul.f32 %v658, 0.6931472
      %v660 = vlog2.pop %v641
      %v661 = vmul.f32 %v660, 0.6931472
      %v662 = vlog2.pop %v642
      %v663 = vmul.f32 %v662, 0.6931472
      %v664 = vlog2.pop %v643
      %v665 = vmul.f32 %v664, 0.6931472
      %v666 = vlog2.pop %v644
      %v667 = vmul.f32 %v666, 0.6931472
      %v668 = vlog2.pop %v645
      %v669 = vmul.f32 %v668, 0.6931472
      %v670 = vlog2.pop %v646
      %v671 = vmul.f32 %v670, 0.6931472
      %v672 = vlog2.pop %v647
      %v673 = vmul.f32 %v672, 0.6931472
      %v674 = vlog2.pop %v648
      %v675 = vmul.f32 %v674, 0.6931472
      %v676 = vlog2.pop %v649
      %v677 = vmul.f32 %v676, 0.6931472
      %v678 = vlog2.pop %v650
      %v679 = vmul.f32 %v678, 0.6931472
      %v680 = vlog2.pop %v651
      %v681 = vmul.f32 %v680, 0.6931472
      %v682 = vlog2.pop %v652
      %v683 = vmul.f32 %v682, 0.6931472
      %v684 = vlog2.pop %v653
      %v685 = vmul.f32 %v684, 0.6931472
      %v686 = vadd.f32 %v558, %v655
      %v687 = vadd.f32 %v559, %v657
      %v688 = vadd.f32 %v560, %v659
      %v689 = vadd.f32 %v561, %v661
      %v690 = vadd.f32 %v562, %v663
      %v691 = vadd.f32 %v563, %v665
      %v692 = vadd.f32 %v564, %v667
      %v693 = vadd.f32 %v565, %v669
      %v694 = vadd.f32 %v566, %v671
      %v695 = vadd.f32 %v567, %v673
      %v696 = vadd.f32 %v568, %v675
      %v697 = vadd.f32 %v569, %v677
      %v698 = vadd.f32 %v570, %v679
      %v699 = vadd.f32 %v571, %v681
      %v700 = vadd.f32 %v572, %v683
      %v701 = vadd.f32 %v573, %v685
      %v702 = vsub.f32 0.0, %v686
      %v703 = vsub.f32 0.0, %v687
      %v704 = vsub.f32 0.0, %v688
      %v705 = vsub.f32 0.0, %v689
      %v706 = vsub.f32 0.0, %v690
      %v707 = vsub.f32 0.0, %v691
      %v708 = vsub.f32 0.0, %v692
      %v709 = vsub.f32 0.0, %v693
      %v710 = vsub.f32 0.0, %v694
      %v711 = vsub.f32 0.0, %v695
      %v712 = vsub.f32 0.0, %v696
      %v713 = vsub.f32 0.0, %v697
      %v714 = vsub.f32 0.0, %v698
      %v715 = vsub.f32 0.0, %v699
      %v716 = vsub.f32 0.0, %v700
      %v717 = vsub.f32 0.0, %v701
      %v718 = vmul.f32 %v702, 1.442695
      %v719 = vpow.pop %v718
      %v720 = vmul.f32 %v703, 1.442695
      %v721 = vpow.pop %v720
      %v722 = vmul.f32 %v704, 1.442695
      %v723 = vpow.pop %v722
      %v724 = vmul.f32 %v705, 1.442695
      %v725 = vpow.pop %v724
      %v726 = vmul.f32 %v706, 1.442695
      %v727 = vpow.pop %v726
      %v728 = vmul.f32 %v707, 1.442695
      %v729 = vpow.pop %v728
      %v730 = vmul.f32 %v708, 1.442695
      %v731 = vpow.pop %v730
      %v732 = vmul.f32 %v709, 1.442695
      %v733 = vpow.pop %v732
      %v734 = vmul.f32 %v710, 1.442695
      %v735 = vpow.pop %v734
      %v736 = vmul.f32 %v711, 1.442695
      %v737 = vpow.pop %v736
      %v738 = vmul.f32 %v712, 1.442695
      %v739 = vpow.pop %v738
      %v740 = vmul.f32 %v713, 1.442695
      %v741 = vpow.pop %v740
      %v742 = vmul.f32 %v714, 1.442695
      %v743 = vpow.pop %v742
      %v744 = vmul.f32 %v715, 1.442695
      %v745 = vpow.pop %v744
      %v746 = vmul.f32 %v716, 1.442695
      %v747 = vpow.pop %v746
      %v748 = vmul.f32 %v717, 1.442695
      %v749 = vpow.pop %v748
      %v750 = vld [vmem:[%s223] sm:$0xff]
      %v751 = vld [vmem:[%s223 + $0x8] sm:$0xff]
      %v752 = vld [vmem:[%s223 + $0x10] sm:$0xff]
      %v753 = vld [vmem:[%s223 + $0x18] sm:$0xff]
      %v754 = vld [vmem:[%s223 + $0x20] sm:$0xff]
      %v755 = vld [vmem:[%s223 + $0x28] sm:$0xff]
      %v756 = vld [vmem:[%s223 + $0x30] sm:$0xff]
      %v757 = vld [vmem:[%s223 + $0x38] sm:$0xff]
      %v758 = vld [vmem:[%s223 + $0x40] sm:$0xff]
      %v759 = vld [vmem:[%s223 + $0x48] sm:$0xff]
      %v760 = vld [vmem:[%s223 + $0x50] sm:$0xff]
      %v761 = vld [vmem:[%s223 + $0x58] sm:$0xff]
      %v762 = vld [vmem:[%s223 + $0x60] sm:$0xff]
      %v763 = vld [vmem:[%s223 + $0x68] sm:$0xff]
      %v764 = vld [vmem:[%s223 + $0x70] sm:$0xff]
      %v765 = vld [vmem:[%s223 + $0x78] sm:$0xff]
      %vm766 = vcmp.lt.f32.partialorder %v750, %v719
      %vm767 = vcmp.lt.f32.partialorder %v751, %v721
      %vm768 = vcmp.lt.f32.partialorder %v752, %v723
      %vm769 = vcmp.lt.f32.partialorder %v753, %v725
      %vm770 = vcmp.lt.f32.partialorder %v754, %v727
      %vm771 = vcmp.lt.f32.partialorder %v755, %v729
      %vm772 = vcmp.lt.f32.partialorder %v756, %v731
      %vm773 = vcmp.lt.f32.partialorder %v757, %v733
      %vm774 = vcmp.lt.f32.partialorder %v758, %v735
      %vm775 = vcmp.lt.f32.partialorder %v759, %v737
      %vm776 = vcmp.lt.f32.partialorder %v760, %v739
      %vm777 = vcmp.lt.f32.partialorder %v761, %v741
      %vm778 = vcmp.lt.f32.partialorder %v762, %v743
      %vm779 = vcmp.lt.f32.partialorder %v763, %v745
      %vm780 = vcmp.lt.f32.partialorder %v764, %v747
      %vm781 = vcmp.lt.f32.partialorder %v765, %v749
      %v782 = vsel %vm766, 1, 0
      %v783 = vsel %vm767, 1, 0
      %v784 = vsel %vm768, 1, 0
      %v785 = vsel %vm769, 1, 0
      %v786 = vsel %vm770, 1, 0
      %v787 = vsel %vm771, 1, 0
      %v788 = vsel %vm772, 1, 0
      %v789 = vsel %vm773, 1, 0
      %v790 = vsel %vm774, 1, 0
      %v791 = vsel %vm775, 1, 0
      %v792 = vsel %vm776, 1, 0
      %v793 = vsel %vm777, 1, 0
      %v794 = vsel %vm778, 1, 0
      %v795 = vsel %vm779, 1, 0
      %v796 = vsel %vm780, 1, 0
      %v797 = vsel %vm781, 1, 0
      %v798 = vcvt.s32.f32 %v782
      %v799 = vcvt.s32.f32 %v783
      %v800 = vcvt.s32.f32 %v784
      %v801 = vcvt.s32.f32 %v785
      %v802 = vcvt.s32.f32 %v786
      %v803 = vcvt.s32.f32 %v787
      %v804 = vcvt.s32.f32 %v788
      %v805 = vcvt.s32.f32 %v789
      %v806 = vcvt.s32.f32 %v790
      %v807 = vcvt.s32.f32 %v791
      %v808 = vcvt.s32.f32 %v792
      %v809 = vcvt.s32.f32 %v793
      %v810 = vcvt.s32.f32 %v794
      %v811 = vcvt.s32.f32 %v795
      %v812 = vcvt.s32.f32 %v796
      %v813 = vcvt.s32.f32 %v797
      %814 = vst [vmem:[%s229] sm:$0xff] %v798
      %815 = vst [vmem:[%s229 + $0x8] sm:$0xff] %v799
      %816 = vst [vmem:[%s229 + $0x10] sm:$0xff] %v800
      %817 = vst [vmem:[%s229 + $0x18] sm:$0xff] %v801
      %818 = vst [vmem:[%s229 + $0x20] sm:$0xff] %v802
      %819 = vst [vmem:[%s229 + $0x28] sm:$0xff] %v803
      %820 = vst [vmem:[%s229 + $0x30] sm:$0xff] %v804
      %821 = vst [vmem:[%s229 + $0x38] sm:$0xff] %v805
      %822 = vst [vmem:[%s229 + $0x40] sm:$0xff] %v806
      %823 = vst [vmem:[%s229 + $0x48] sm:$0xff] %v807
      %824 = vst [vmem:[%s229 + $0x50] sm:$0xff] %v808
      %825 = vst [vmem:[%s229 + $0x58] sm:$0xff] %v809
      %826 = vst [vmem:[%s229 + $0x60] sm:$0xff] %v810
      %827 = vst [vmem:[%s229 + $0x68] sm:$0xff] %v811
      %828 = vst [vmem:[%s229 + $0x70] sm:$0xff] %v812
      %829 = vst [vmem:[%s229 + $0x78] sm:$0xff] %v813
      %v830 = vsub.f32 %v798, 1.0
      %v831 = vsub.f32 %v799, 1.0
      %v832 = vsub.f32 %v800, 1.0
      %v833 = vsub.f32 %v801, 1.0
      %v834 = vsub.f32 %v802, 1.0
      %v835 = vsub.f32 %v803, 1.0
      %v836 = vsub.f32 %v804, 1.0
      %v837 = vsub.f32 %v805, 1.0
      %v838 = vsub.f32 %v806, 1.0
      %v839 = vsub.f32 %v807, 1.0
      %v840 = vsub.f32 %v808, 1.0
      %v841 = vsub.f32 %v809, 1.0
      %v842 = vsub.f32 %v810, 1.0
      %v843 = vsub.f32 %v811, 1.0
      %v844 = vsub.f32 %v812, 1.0
      %v845 = vsub.f32 %v813, 1.0
      %v846 = vmul.f32 %v830, %v503
      %v847 = vmul.f32 %v831, %v505
      %v848 = vmul.f32 %v832, %v508
      %v849 = vmul.f32 %v833, %v510
      %v850 = vmul.f32 %v834, %v513
      %v851 = vmul.f32 %v835, %v515
      %v852 = vmul.f32 %v836, %v518
      %v853 = vmul.f32 %v837, %v520
      %v854 = vmul.f32 %v838, %v523
      %v855 = vmul.f32 %v839, %v525
      %v856 = vmul.f32 %v840, %v528
      %v857 = vmul.f32 %v841, %v530
      %v858 = vmul.f32 %v842, %v533
      %v859 = vmul.f32 %v843, %v535
      %v860 = vmul.f32 %v844, %v538
      %v861 = vmul.f32 %v845, %v540
      %v862 = vsub.f32 %v846, %v686
      %v863 = vsub.f32 %v847, %v687
      %v864 = vsub.f32 %v848, %v688
      %v865 = vsub.f32 %v849, %v689
      %v866 = vsub.f32 %v850, %v690
      %v867 = vsub.f32 %v851, %v691
      %v868 = vsub.f32 %v852, %v692
      %v869 = vsub.f32 %v853, %v693
      %v870 = vsub.f32 %v854, %v694
      %v871 = vsub.f32 %v855, %v695
      %v872 = vsub.f32 %v856, %v696
      %v873 = vsub.f32 %v857, %v697
      %v874 = vsub.f32 %v858, %v698
      %v875 = vsub.f32 %v859, %v699
      %v876 = vsub.f32 %v860, %v700
      %v877 = vsub.f32 %v861, %v701
      %v878 = vlaneseq
      %v879 = vand.u32 %v878, 127
      %vm880 = vcmp.lt.s32.totalorder %v879, 16
      %v881 = vsel %vm880, %v862, 0.0
      %v882 = vsel %vm880, %v863, 0.0
      %v883 = vsel %vm880, %v864, 0.0
      %v884 = vsel %vm880, %v865, 0.0
      %v885 = vsel %vm880, %v866, 0.0
      %v886 = vsel %vm880, %v867, 0.0
      %v887 = vsel %vm880, %v868, 0.0
      %v888 = vsel %vm880, %v869, 0.0
      %v889 = vsel %vm880, %v870, 0.0
      %v890 = vsel %vm880, %v871, 0.0
      %v891 = vsel %vm880, %v872, 0.0
      %v892 = vsel %vm880, %v873, 0.0
      %v893 = vsel %vm880, %v874, 0.0
      %v894 = vsel %vm880, %v875, 0.0
      %v895 = vsel %vm880, %v876, 0.0
      %v896 = vsel %vm880, %v877, 0.0
      %897 = vadd.xlane.f32.xlu0 %v881
      %v898 = vpop.xlane.xlu0 %897
      %899 = vadd.xlane.f32.xlu0 %v882
      %v900 = vpop.xlane.xlu0 %899
      %901 = vadd.xlane.f32.xlu0 %v883
      %v902 = vpop.xlane.xlu0 %901
      %903 = vadd.xlane.f32.xlu0 %v884
      %v904 = vpop.xlane.xlu0 %903
      %905 = vadd.xlane.f32.xlu0 %v885
      %v906 = vpop.xlane.xlu0 %905
      %907 = vadd.xlane.f32.xlu0 %v886
      %v908 = vpop.xlane.xlu0 %907
      %909 = vadd.xlane.f32.xlu0 %v887
      %v910 = vpop.xlane.xlu0 %909
      %911 = vadd.xlane.f32.xlu0 %v888
      %v912 = vpop.xlane.xlu0 %911
      %913 = vadd.xlane.f32.xlu0 %v889
      %v914 = vpop.xlane.xlu0 %913
      %915 = vadd.xlane.f32.xlu0 %v890
      %v916 = vpop.xlane.xlu0 %915
      %917 = vadd.xlane.f32.xlu0 %v891
      %v918 = vpop.xlane.xlu0 %917
      %919 = vadd.xlane.f32.xlu0 %v892
      %v920 = vpop.xlane.xlu0 %919
      %921 = vadd.xlane.f32.xlu0 %v893
      %v922 = vpop.xlane.xlu0 %921
      %923 = vadd.xlane.f32.xlu0 %v894
      %v924 = vpop.xlane.xlu0 %923
      %925 = vadd.xlane.f32.xlu0 %v895
      %v926 = vpop.xlane.xlu0 %925
      %927 = vadd.xlane.f32.xlu0 %v896
      %v928 = vpop.xlane.xlu0 %927
      %929 = vst [vmem:[%s235] sm:$0xff] %v898
      %930 = vst [vmem:[%s235 + $0x8] sm:$0xff] %v900
      %931 = vst [vmem:[%s235 + $0x10] sm:$0xff] %v902
      %932 = vst [vmem:[%s235 + $0x18] sm:$0xff] %v904
      %933 = vst [vmem:[%s235 + $0x20] sm:$0xff] %v906
      %934 = vst [vmem:[%s235 + $0x28] sm:$0xff] %v908
      %935 = vst [vmem:[%s235 + $0x30] sm:$0xff] %v910
      %936 = vst [vmem:[%s235 + $0x38] sm:$0xff] %v912
      %937 = vst [vmem:[%s235 + $0x40] sm:$0xff] %v914
      %938 = vst [vmem:[%s235 + $0x48] sm:$0xff] %v916
      %939 = vst [vmem:[%s235 + $0x50] sm:$0xff] %v918
      %940 = vst [vmem:[%s235 + $0x58] sm:$0xff] %v920
      %941 = vst [vmem:[%s235 + $0x60] sm:$0xff] %v922
      %942 = vst [vmem:[%s235 + $0x68] sm:$0xff] %v924
      %943 = vst [vmem:[%s235 + $0x70] sm:$0xff] %v926
      %944 = vst [vmem:[%s235 + $0x78] sm:$0xff] %v928
      %s945 = smul.u32 16, %s16
      %p946 = scmp.lt.s32.totalorder %s945, 31
      %s947 = scalar_select %p946, %s945, 31
      %s948 = smul.addr %s947, 8
      %s949 = scalar_lea.vmem %s3, %s948
      %s950 = smul.u32 16, %s16
      %p951 = scmp.lt.s32.totalorder %s950, 31
      %s952 = scalar_select %p951, %s950, 31
      %s953 = smul.addr %s952, 8
      %s954 = scalar_lea.vmem %s4, %s953
      // Predicated region
      $region33: #{nn_initialisation_policy_forward_batch.1} parent=31 // pred_check
        %p955 = pneg %p107
      $region34: #{nn_initialisation_policy_forward_batch.1} parent=31 // pred_check_branch
        %957 = sbr.rel (%p955) target = $region36
      $region35: #{nn_initialisation_policy_forward_batch.1} parent=31 // pred_region
        %s958 = smul.u32 16, %s16
      $region36: #{nn_initialisation_policy_forward_batch.1} parent=31 // pred_fallthru
        _
      // Predicated region
      $region37: #{nn_initialisation_policy_forward_batch.1} parent=31 // pred_check
        %p959 = pneg %p133
      $region38: #{nn_initialisation_policy_forward_batch.1} parent=31 // pred_check_branch
        %961 = sbr.rel (%p959) target = $region40
      $region39: #{nn_initialisation_policy_forward_batch.1} parent=31 // pred_region
        %s962 = smul.u32 16, %s16
      $region40: #{nn_initialisation_policy_forward_batch.1} parent=31 // pred_fallthru
        _
    $region32: #{nn_initialisation_policy_forward_batch.1} parent=5 // pred_fallthru
      _
    %p963 = scmp.le.s32.totalorder 2, %s11
    // Predicated region
    $region41: #{nn_initialisation_policy_forward_batch.1} parent=5 // pred_check
      %p964 = pneg %p963
    $region42: #{nn_initialisation_policy_forward_batch.1} parent=5 // pred_check_branch
      %966 = sbr.rel (%p964) target = $region44
    $region43: #{nn_initialisation_policy_forward_batch.1} parent=5 // pred_region
      %s967 = ssub.s32 %s11, 2
      // Predicated region
      $region45: #{nn_initialisation_policy_forward_batch.1} parent=43 // pred_check
        %p968 = pneg %p113
      $region46: #{nn_initialisation_policy_forward_batch.1} parent=43 // pred_check_branch
        %970 = sbr.rel (%p968) target = $region48
      $region47: #{nn_initialisation_policy_forward_batch.1} parent=43 // pred_region
        %s971 = smul.u32 16, %s17
        %p972 = scmp.lt.s32.totalorder %s971, 31
        %s973 = scalar_select %p972, %s971, 31
        %s974 = smul.addr %s973, 8
        %s975 = scalar_lea.vmem %s3, %s974
      $region48: #{nn_initialisation_policy_forward_batch.1} parent=43 // pred_fallthru
        _
      // Predicated region
      $region49: #{nn_initialisation_policy_forward_batch.1} parent=43 // pred_check
        %p976 = pneg %p139
      $region50: #{nn_initialisation_policy_forward_batch.1} parent=43 // pred_check_branch
        %978 = sbr.rel (%p976) target = $region52
      $region51: #{nn_initialisation_policy_forward_batch.1} parent=43 // pred_region
        %s979 = smul.u32 16, %s17
        %p980 = scmp.lt.s32.totalorder %s979, 31
        %s981 = scalar_select %p980, %s979, 31
        %s982 = smul.addr %s981, 8
        %s983 = scalar_lea.vmem %s4, %s982
      $region52: #{nn_initialisation_policy_forward_batch.1} parent=43 // pred_fallthru
        _
    $region44: #{nn_initialisation_policy_forward_batch.1} parent=5 // pred_fallthru
      _
  $region6: #{nn_initialisation_policy_forward_batch.1} parent=0 // loop_footer
    %s15 = sadd.s32 1, %s11
  $region7: #{nn_initialisation_policy_forward_batch.1} parent=0 // loop_footer_branch
    %10 = sbr.rel target = $region3
  $region8: #{nn_initialisation_policy_forward_batch.1} parent=0 // loop_exit
    _

</llo_original>
